<compile_context>
chip_gen: v7x
topology: tpu7x:2x2x1
jax: 0.10.0
libtpu: 0.0.40
codegen_flags: <defaults>
</compile_context>

<pallas_src>
import functools

import jax
import jax.numpy as jnp
from jax.experimental import pallas as pl
from jax.experimental.pallas import tpu as pltpu


def _round_up(v: int, m: int) -> int:
    return ((v + m - 1) // m) * m


def _pick_tile(n_pad: int, want: int) -> int:
    """Largest multiple of 128 that is <= `want` and divides `n_pad`."""
    t = max(128, min(want, n_pad))
    t -= t % 128
    while n_pad % t:
        t -= 128
    return t


# ---------------------------------------------------------------------------
# Small-N path: single whole-array invocation, operand + result VMEM-resident.
# ---------------------------------------------------------------------------
def _mm6_whole_kernel(x_ref, o_ref, *, precision):
    x = x_ref[...]
    acc = jnp.dot(x, x, preferred_element_type=jnp.float32, precision=precision)
    # (t1+t1), (t2=t1+t1), (t2=t2+t1)  ==  6 * t1, folded into one scale.
    o_ref[...] = (6.0 * acc).astype(o_ref.dtype)


def _mm6_whole(x, *, precision):
    n = x.shape[0]
    return pl.pallas_call(
        functools.partial(_mm6_whole_kernel, precision=precision),
        out_shape=jax.ShapeDtypeStruct((n, n), x.dtype),
        in_specs=[pl.BlockSpec(memory_space=pltpu.MemorySpace.VMEM)],
        out_specs=pl.BlockSpec(memory_space=pltpu.MemorySpace.VMEM),
        cost_estimate=pl.CostEstimate(
            flops=2 * n * n * n,
            transcendentals=0,
            bytes_accessed=2 * 4 * n * n,
        ),
    )(x)


# ---------------------------------------------------------------------------
# Large-N path: K-tiled accumulator grid (parallel M/N axes, arbitrary K).
# ---------------------------------------------------------------------------
def _mm6_tiled_kernel(a_ref, b_ref, o_ref, acc_ref, *, precision):
    k = pl.program_id(2)

    @pl.when(k == 0)
    def _():
        acc_ref[...] = jnp.zeros_like(acc_ref)

    acc_ref[...] += jnp.dot(
        a_ref[...], b_ref[...],
        preferred_element_type=jnp.float32, precision=precision)

    @pl.when(k == pl.num_programs(2) - 1)
    def _():
        # Scale + cast once per output tile (not per K step); lane-dense tile
        # (tn multiple of 128) keeps the store an unmasked vst.
        o_ref[...] = (6.0 * acc_ref[...]).astype(o_ref.dtype)


def _mm6_tiled(x, *, tm=256, tn=256, tk=512,
               precision=jax.lax.Precision.DEFAULT):
    n = x.shape[0]
    n_pad = _round_up(n, 128)
    tm = _pick_tile(n_pad, tm)
    tn = _pick_tile(n_pad, tn)
    tk = _pick_tile(n_pad, tk)

    if n_pad != n:
        # Single pad op; zero padding is exact for mm. Negligible at large N.
        xp = jnp.pad(x, ((0, n_pad - n), (0, n_pad - n)))
    else:
        xp = x

    grid = (n_pad // tm, n_pad // tn, n_pad // tk)
    out = pl.pallas_call(
        functools.partial(_mm6_tiled_kernel, precision=precision),
        out_shape=jax.ShapeDtypeStruct((n_pad, n_pad), x.dtype),
        grid_spec=pltpu.PrefetchScalarGridSpec(
            num_scalar_prefetch=0,
            grid=grid,
            # x is passed twice: one BlockSpec cannot deliver both the (i,k)
            # LHS tile and the (k,j) RHS tile; two small tiles per step keep
            # per-step VMEM tiny and let BlockSpec double-buffer the pipeline.
            in_specs=[pl.BlockSpec((tm, tk), lambda i, j, k: (i, k)),
                      pl.BlockSpec((tk, tn), lambda i, j, k: (k, j))],
            out_specs=pl.BlockSpec((tm, tn), lambda i, j, k: (i, j)),
            scratch_shapes=[pltpu.VMEM((tm, tn), jnp.float32)],
        ),
        compiler_params=pltpu.CompilerParams(
            dimension_semantics=("parallel", "parallel", "arbitrary")),
        cost_estimate=pl.CostEstimate(
            flops=2 * n_pad * n_pad * n_pad,
            transcendentals=0,
            bytes_accessed=3 * 4 * n_pad * n_pad,
        ),
    )(xp, xp)

    if n_pad != n:
        out = out[:n, :n]
    return out


def model_forward(x: jax.Array, *, small_n_threshold: int = 1024,
                  precision=None) -> jax.Array:
    """Forward pass of the Model: returns 6 * (x @ x)."""
    n, m = x.shape
    assert n == m, "torch.mm(x, x) requires a square matrix"
    if n <= small_n_threshold:
        # Whole-array path: HIGHEST precision is free at tiny N and matches
        # torch's f32 mm closely.
        p = jax.lax.Precision.HIGHEST if precision is None else precision
        return _mm6_whole(x, precision=p)
    # Tiled path (keeps v7x's 64 MiB / 32 MiB-scoped VMEM happy, uses both
    # TensorCores). One bf16 MXU pass by default; pass HIGH/HIGHEST if closer
    # f32 fidelity is needed (3x / 6x the vmatmul count).
    p = jax.lax.Precision.DEFAULT if precision is None else precision
    return _mm6_tiled(x, precision=p)


if __name__ == "__main__":
    key = jax.random.PRNGKey(0)

    # Small square consistent with torch.mm(x, x).
    N = 32
    x = jax.random.normal(key, (N, N), dtype=jnp.float32)
    out = jax.block_until_ready(model_forward(x))
    ref = 6.0 * jnp.dot(x, x, precision=jax.lax.Precision.HIGHEST)
    assert out.shape == (N, N) and out.dtype == jnp.float32
    assert jnp.allclose(out, ref, rtol=1e-4, atol=1e-4), "small-N mismatch"

    # Also exercise the K-tiled accumulator path once at a modest size
    # (forced through the tiled code path with 128 tiles so it stays cheap).
    N2 = 256
    x2 = jax.random.normal(jax.random.fold_in(key, 1), (N2, N2),
                           dtype=jnp.float32)
    prec = jax.lax.Precision.DEFAULT
    out2 = jax.block_until_ready(
        _mm6_tiled(x2, tm=128, tn=128, tk=128, precision=prec))
    ref2 = 6.0 * jnp.dot(x2, x2, precision=prec)
    assert out2.shape == (N2, N2)
    assert jnp.allclose(out2, ref2, rtol=1e-3, atol=1e-3), "tiled mismatch"

    print("KERNEL_OK")
</pallas_src>

<mosaic_0001>
module attributes {stable_mosaic.version = 11 : i64} {
  func.func @_mm6_whole_kernel(%arg0: memref<32x32xf32, #tpu.memory_space<vmem>>, %arg1: memref<32x32xf32, #tpu.memory_space<vmem>>) attributes {dimension_semantics = [], scalar_prefetch = 0 : i64, scratch_operands = 0 : i64, tpu.core_type = #tpu.core_type<tc>} {
    %c0 = arith.constant 0 : index
    %c0_0 = arith.constant 0 : index
    %0 = vector.load %arg0[%c0, %c0_0] : memref<32x32xf32, #tpu.memory_space<vmem>>, vector<32x32xf32>
    %cst = arith.constant dense<0.000000e+00> : vector<32x32xf32>
    %1 = tpu.matmul %0, %0, %cst {dimension_numbers = #tpu.dot_dimension_numbers<[1], [0], [0], [1], [0, 0, 1, 1], [], []>, precision = #tpu.contract_precision<fp32>} : vector<32x32xf32>, vector<32x32xf32>, vector<32x32xf32> -> vector<32x32xf32>
    %cst_1 = arith.constant 6.000000e+00 : f32
    %2 = vector.broadcast %cst_1 : f32 to vector<32x32xf32>
    %3 = arith.mulf %2, %1 : vector<32x32xf32>
    %c0_2 = arith.constant 0 : index
    %c0_3 = arith.constant 0 : index
    %4 = vector.load %arg1[%c0_2, %c0_3] : memref<32x32xf32, #tpu.memory_space<vmem>>, vector<32x32xf32>
    tpu.vector_store %arg1[%c0_2, %c0_3], %3 {strides = array<i32>} : memref<32x32xf32, #tpu.memory_space<vmem>>, vector<32x32xf32>,
    return
  }
}

</mosaic_0001>

<llo_original>
// kernel: tpu_custom_call.1
$region0: #{tpu_custom_call.1}
  #allocation0 [shape = 'u32[]', space=smem, size = 0x4, offset = 0x4, fixed_abs, tag = 'smem constant byte address 0x4 - core index']
  #allocation1 [shape = 'u32[144,128]{1,0:T(1,128)}', space=vmem, size = 0x12000, scoped, tag = 'internal scratch']
  %s0 = inlined_call_operand.hbm [shape: f32[32,32], index: 0, kind: input, shape index: {}]
  %s1 = inlined_call_operand.hbm [shape: f32[32,32], index: 1, kind: output, shape index: {}]
  %s2 = sld [smem:[#allocation0]]
  $region18: #{tpu_custom_call.1} parent=0
    _
  %s4 = ssub.s32 1, %s2
  %s5 = scalar_select 0, %s4, %s2
  $region1: #{tpu_custom_call.1} parent=0
    #allocation2 [shape = 'u8[16384]{0}', space=vmem, size = 0x4000, scoped, tag = 'input window, operand 0, single buffered']
    #allocation3 [shape = 's32[1]{0}', space=sflag, size = 0x4, scoped, tag = 'scoped memory for tpu_custom_call.1']
    #allocation4 [shape = 's32[1]{0}', space=sflag, size = 0x4, scoped, tag = 'scoped memory for tpu_custom_call.1']
    #allocation5 [shape = 'u8[16384]{0}', space=vmem, size = 0x4000, scoped, tag = 'output window, operand 0, single buffered']
    %6 = vsyncpa [#allocation3], 0
    %7 = vsyncpa [#allocation4], 0
    // Predicated region
    $region2: #{tpu_custom_call.1} parent=1 // pred_check
      _
    $region3: #{tpu_custom_call.1} parent=1 // pred_check_branch
      %9 = sbr.rel (0) target = $region5
    $region4: #{tpu_custom_call.1} parent=1 // pred_region
      %s11 = ssub.s32 512, 512
      %12 = vsyncadd [#allocation3], %s11
      %s13 = sshll.u32 [#allocation2], 4
      %s14 = int_to_ptr.vmem [resolvable:$true] %s13
      %19 = dma.hbm_to_vmem [thread:$0]  %s0, 512, %s14, [#allocation3], 128, 128, 8
    $region5: #{tpu_custom_call.1} parent=1 // pred_fallthru
      _
    // Predicated region
    $region6: #{tpu_custom_call.1} parent=1 // pred_check
      _
    $region7: #{tpu_custom_call.1} parent=1 // pred_check_branch
      %21 = sbr.rel (0) target = $region9
    $region8: #{tpu_custom_call.1} parent=1 // pred_region
      %22 = dma.done [#allocation3], 512
    $region9: #{tpu_custom_call.1} parent=1 // pred_fallthru
      _
    %v23 = vld [vmem:[#allocation2] sm:$0xff]
    %v24 = vld [vmem:[#allocation2 + $0x8] sm:$0xff]
    %v25 = vld [vmem:[#allocation2 + $0x10] sm:$0xff]
    %v26 = vld [vmem:[#allocation2 + $0x18] sm:$0xff]
    %vm27 = vcmask 261120
    %v29 = vsel %vm27, %v23, 0
    %v32 = vsel %vm27, %v24, 0
    %v35 = vsel %vm27, %v25, 0
    %v38 = vsel %vm27, %v26, 0
    %40 = vmatprep.subr.mxu0 0.0
    %v41 = vand.u32 %v23, 4294901760
    %42 = vmatpush1.msra.mxu0 %v41
    %43 = vmatprep.subr.mxu0 0.0
    %v44 = vand.u32 %v24, 4294901760
    %45 = vmatpush1.msra.mxu0 %v44
    %46 = vmatprep.subr.mxu0 0.0
    %v47 = vand.u32 %v25, 4294901760
    %48 = vmatpush1.msra.mxu0 %v47
    %49 = vmatprep.subr.mxu0 0.0
    %v50 = vand.u32 %v26, 4294901760
    %51 = vmatpush1.msra.mxu0 %v50
    %52 = vmatprep.subr.mxu0 0.0
    %53 = vmatpush1.msra.mxu0 0.0
    %54 = vmatprep.subr.mxu0 0.0
    %55 = vmatpush1.msra.mxu0 0.0
    %56 = vmatprep.subr.mxu0 0.0
    %57 = vmatpush1.msra.mxu0 0.0
    %58 = vmatprep.subr.mxu0 0.0
    %59 = vmatpush1.msra.mxu0 0.0
    %60 = vmatprep.subr.mxu0 0.0
    %61 = vmatpush1.msra.mxu0 0.0
    %62 = vmatprep.subr.mxu0 0.0
    %63 = vmatpush1.msra.mxu0 0.0
    %64 = vmatprep.subr.mxu0 0.0
    %65 = vmatpush1.msra.mxu0 0.0
    %66 = vmatprep.subr.mxu0 0.0
    %67 = vmatpush1.msra.mxu0 0.0
    %68 = vmatprep.subr.mxu0 0.0
    %69 = vmatpush1.msra.mxu0 0.0
    %70 = vmatprep.subr.mxu0 0.0
    %71 = vmatpush1.msra.mxu0 0.0
    %72 = vmatprep.subr.mxu0 0.0
    %73 = vmatpush1.msra.mxu0 0.0
    %74 = vmatprep.subr.mxu0 0.0
    %75 = vmatpush1.msra.mxu0 0.0
    %76 = vmatprep.subr.mxu0 0.0
    %77 = vmatpush1.msra.mxu0 0.0
    %78 = vmatprep.subr.mxu0 0.0
    %79 = vmatpush1.msra.mxu0 0.0
    %80 = vmatprep.subr.mxu0 0.0
    %81 = vmatpush1.msra.mxu0 0.0
    %82 = vmatprep.subr.mxu0 0.0
    %83 = vmatpush1.msra.mxu0 0.0
    %84 = vmatprep.subr.mxu0 0.0
    %85 = vmatpush1.msra.mxu0 0.0
    %86 = vmatprep.subr.mxu0 0.0
    %87 = vmatpush1.msra.mxu0 0.0
    %88 = vmatprep.subr.mxu0 0.0
    %89 = vmatpush1.msra.mxu0 0.0
    %90 = vmatprep.subr.mxu0 0.0
    %91 = vmatpush1.msra.mxu0 0.0
    %92 = vmatprep.subr.mxu0 0.0
    %93 = vmatpush1.msra.mxu0 0.0
    %94 = vmatprep.subr.mxu0 0.0
    %95 = vmatpush1.msra.mxu0 0.0
    %96 = vmatprep.subr.mxu0 0.0
    %97 = vmatpush1.msra.mxu0 0.0
    %98 = vmatprep.subr.mxu0 0.0
    %99 = vmatpush1.msra.mxu0 0.0
    %100 = vmatprep.subr.mxu0 0.0
    %101 = vmatpush1.msra.mxu0 0.0
    %102 = vmatprep.subr.mxu0 0.0
    %103 = vmatpush1.msra.mxu0 0.0
    %104 = vmatprep.subr.mxu0 0.0
    %105 = vmatpush1.msra.mxu0 0.0
    %106 = vmatprep.subr.mxu0 0.0
    %107 = vmatpush1.msra.mxu0 0.0
    %108 = vmatprep.mubr.f32.mxu0 0.0
    %v109 = vand.u32 %v29, 4294901760
    %v110 = vsub.f32 %v29, %v109
    %v111 = vand.u32 %v110, 4294901760
    %v112 = vsub.f32 %v110, %v111
    %v113 = vand.u32 %v112, 4294901760
    %114 = vmatmul.mubr.f32.gmra.mrb[0].mxu0 %v113
    %v115 = vpop.f32.mrb[0].mxu0
    %v116 = vadd.f32 0.0, %v115
    %v117 = vpop.f32.mrb[0].mxu0
    %118 = vmatprep.mubr.f32.mxu0 0.0
    %v119 = vand.u32 %v32, 4294901760
    %v120 = vsub.f32 %v32, %v119
    %v121 = vand.u32 %v120, 4294901760
    %v122 = vsub.f32 %v120, %v121
    %v123 = vand.u32 %v122, 4294901760
    %124 = vmatmul.mubr.f32.gmra.mrb[0].mxu0 %v123
    %v125 = vpop.f32.mrb[0].mxu0
    %v126 = vadd.f32 0.0, %v125
    %v127 = vpop.f32.mrb[0].mxu0
    %128 = vmatprep.mubr.f32.mxu0 0.0
    %v129 = vand.u32 %v35, 4294901760
    %v130 = vsub.f32 %v35, %v129
    %v131 = vand.u32 %v130, 4294901760
    %v132 = vsub.f32 %v130, %v131
    %v133 = vand.u32 %v132, 4294901760
    %134 = vmatmul.mubr.f32.gmra.mrb[0].mxu0 %v133
    %v135 = vpop.f32.mrb[0].mxu0
    %v136 = vadd.f32 0.0, %v135
    %v137 = vpop.f32.mrb[0].mxu0
    %138 = vmatprep.mubr.f32.mxu0 0.0
    %v139 = vand.u32 %v38, 4294901760
    %v140 = vsub.f32 %v38, %v139
    %v141 = vand.u32 %v140, 4294901760
    %v142 = vsub.f32 %v140, %v141
    %v143 = vand.u32 %v142, 4294901760
    %144 = vmatmul.mubr.f32.gmra.mrb[0].mxu0 %v143
    %v145 = vpop.f32.mrb[0].mxu0
    %v146 = vadd.f32 0.0, %v145
    %v147 = vpop.f32.mrb[0].mxu0
    %148 = vdwg.mxu0
    %149 = vmatprep.subr.mxu0 0.0
    %v150 = vand.u32 %v23, 4294901760
    %v151 = vsub.f32 %v23, %v150
    %v152 = vand.u32 %v151, 4294901760
    %v153 = vsub.f32 %v151, %v152
    %v154 = vand.u32 %v153, 4294901760
    %155 = vmatpush1.msra.mxu0 %v154
    %156 = vmatprep.subr.mxu0 0.0
    %v157 = vand.u32 %v24, 4294901760
    %v158 = vsub.f32 %v24, %v157
    %v159 = vand.u32 %v158, 4294901760
    %v160 = vsub.f32 %v158, %v159
    %v161 = vand.u32 %v160, 4294901760
    %162 = vmatpush1.msra.mxu0 %v161
    %163 = vmatprep.subr.mxu0 0.0
    %v164 = vand.u32 %v25, 4294901760
    %v165 = vsub.f32 %v25, %v164
    %v166 = vand.u32 %v165, 4294901760
    %v167 = vsub.f32 %v165, %v166
    %v168 = vand.u32 %v167, 4294901760
    %169 = vmatpush1.msra.mxu0 %v168
    %170 = vmatprep.subr.mxu0 0.0
    %v171 = vand.u32 %v26, 4294901760
    %v172 = vsub.f32 %v26, %v171
    %v173 = vand.u32 %v172, 4294901760
    %v174 = vsub.f32 %v172, %v173
    %v175 = vand.u32 %v174, 4294901760
    %176 = vmatpush1.msra.mxu0 %v175
    %177 = vmatprep.subr.mxu0 0.0
    %178 = vmatpush1.msra.mxu0 0.0
    %179 = vmatprep.subr.mxu0 0.0
    %180 = vmatpush1.msra.mxu0 0.0
    %181 = vmatprep.subr.mxu0 0.0
    %182 = vmatpush1.msra.mxu0 0.0
    %183 = vmatprep.subr.mxu0 0.0
    %184 = vmatpush1.msra.mxu0 0.0
    %185 = vmatprep.subr.mxu0 0.0
    %186 = vmatpush1.msra.mxu0 0.0
    %187 = vmatprep.subr.mxu0 0.0
    %188 = vmatpush1.msra.mxu0 0.0
    %189 = vmatprep.subr.mxu0 0.0
    %190 = vmatpush1.msra.mxu0 0.0
    %191 = vmatprep.subr.mxu0 0.0
    %192 = vmatpush1.msra.mxu0 0.0
    %193 = vmatprep.subr.mxu0 0.0
    %194 = vmatpush1.msra.mxu0 0.0
    %195 = vmatprep.subr.mxu0 0.0
    %196 = vmatpush1.msra.mxu0 0.0
    %197 = vmatprep.subr.mxu0 0.0
    %198 = vmatpush1.msra.mxu0 0.0
    %199 = vmatprep.subr.mxu0 0.0
    %200 = vmatpush1.msra.mxu0 0.0
    %201 = vmatprep.subr.mxu0 0.0
    %202 = vmatpush1.msra.mxu0 0.0
    %203 = vmatprep.subr.mxu0 0.0
    %204 = vmatpush1.msra.mxu0 0.0
    %205 = vmatprep.subr.mxu0 0.0
    %206 = vmatpush1.msra.mxu0 0.0
    %207 = vmatprep.subr.mxu0 0.0
    %208 = vmatpush1.msra.mxu0 0.0
    %209 = vmatprep.subr.mxu0 0.0
    %210 = vmatpush1.msra.mxu0 0.0
    %211 = vmatprep.subr.mxu0 0.0
    %212 = vmatpush1.msra.mxu0 0.0
    %213 = vmatprep.subr.mxu0 0.0
    %214 = vmatpush1.msra.mxu0 0.0
    %215 = vmatprep.subr.mxu0 0.0
    %216 = vmatpush1.msra.mxu0 0.0
    %217 = vmatprep.subr.mxu0 0.0
    %218 = vmatpush1.msra.mxu0 0.0
    %219 = vmatprep.subr.mxu0 0.0
    %220 = vmatpush1.msra.mxu0 0.0
    %221 = vmatprep.subr.mxu0 0.0
    %222 = vmatpush1.msra.mxu0 0.0
    %223 = vmatprep.subr.mxu0 0.0
    %224 = vmatpush1.msra.mxu0 0.0
    %225 = vmatprep.subr.mxu0 0.0
    %226 = vmatpush1.msra.mxu0 0.0
    %227 = vmatprep.subr.mxu0 0.0
    %228 = vmatpush1.msra.mxu0 0.0
    %229 = vmatprep.subr.mxu0 0.0
    %230 = vmatpush1.msra.mxu0 0.0
    %231 = vmatprep.subr.mxu0 0.0
    %232 = vmatpush1.msra.mxu0 0.0
    %233 = vmatprep.mubr.f32.mxu0 0.0
    %v234 = vand.u32 %v29, 4294901760
    %235 = vmatmul.mubr.f32.gmra.mrb[0].mxu0 %v234
    %v236 = vpop.f32.mrb[0].mxu0
    %v237 = vadd.f32 %v116, %v236
    %v238 = vpop.f32.mrb[0].mxu0
    %239 = vmatprep.mubr.f32.mxu0 0.0
    %v240 = vand.u32 %v32, 4294901760
    %241 = vmatmul.mubr.f32.gmra.mrb[0].mxu0 %v240
    %v242 = vpop.f32.mrb[0].mxu0
    %v243 = vadd.f32 %v126, %v242
    %v244 = vpop.f32.mrb[0].mxu0
    %245 = vmatprep.mubr.f32.mxu0 0.0
    %v246 = vand.u32 %v35, 4294901760
    %247 = vmatmul.mubr.f32.gmra.mrb[0].mxu0 %v246
    %v248 = vpop.f32.mrb[0].mxu0
    %v249 = vadd.f32 %v136, %v248
    %v250 = vpop.f32.mrb[0].mxu0
    %251 = vmatprep.mubr.f32.mxu0 0.0
    %v252 = vand.u32 %v38, 4294901760
    %253 = vmatmul.mubr.f32.gmra.mrb[0].mxu0 %v252
    %v254 = vpop.f32.mrb[0].mxu0
    %v255 = vadd.f32 %v146, %v254
    %v256 = vpop.f32.mrb[0].mxu0
    %257 = vdwg.mxu0
    %258 = vmatprep.subr.mxu0 0.0
    %v259 = vand.u32 %v23, 4294901760
    %v260 = vsub.f32 %v23, %v259
    %261 = vmatpush1.msra.mxu0 %v260
    %262 = vmatprep.subr.mxu0 0.0
    %v263 = vand.u32 %v24, 4294901760
    %v264 = vsub.f32 %v24, %v263
    %265 = vmatpush1.msra.mxu0 %v264
    %266 = vmatprep.subr.mxu0 0.0
    %v267 = vand.u32 %v25, 4294901760
    %v268 = vsub.f32 %v25, %v267
    %269 = vmatpush1.msra.mxu0 %v268
    %270 = vmatprep.subr.mxu0 0.0
    %v271 = vand.u32 %v26, 4294901760
    %v272 = vsub.f32 %v26, %v271
    %273 = vmatpush1.msra.mxu0 %v272
    %274 = vmatprep.subr.mxu0 0.0
    %275 = vmatpush1.msra.mxu0 0.0
    %276 = vmatprep.subr.mxu0 0.0
    %277 = vmatpush1.msra.mxu0 0.0
    %278 = vmatprep.subr.mxu0 0.0
    %279 = vmatpush1.msra.mxu0 0.0
    %280 = vmatprep.subr.mxu0 0.0
    %281 = vmatpush1.msra.mxu0 0.0
    %282 = vmatprep.subr.mxu0 0.0
    %283 = vmatpush1.msra.mxu0 0.0
    %284 = vmatprep.subr.mxu0 0.0
    %285 = vmatpush1.msra.mxu0 0.0
    %286 = vmatprep.subr.mxu0 0.0
    %287 = vmatpush1.msra.mxu0 0.0
    %288 = vmatprep.subr.mxu0 0.0
    %289 = vmatpush1.msra.mxu0 0.0
    %290 = vmatprep.subr.mxu0 0.0
    %291 = vmatpush1.msra.mxu0 0.0
    %292 = vmatprep.subr.mxu0 0.0
    %293 = vmatpush1.msra.mxu0 0.0
    %294 = vmatprep.subr.mxu0 0.0
    %295 = vmatpush1.msra.mxu0 0.0
    %296 = vmatprep.subr.mxu0 0.0
    %297 = vmatpush1.msra.mxu0 0.0
    %298 = vmatprep.subr.mxu0 0.0
    %299 = vmatpush1.msra.mxu0 0.0
    %300 = vmatprep.subr.mxu0 0.0
    %301 = vmatpush1.msra.mxu0 0.0
    %302 = vmatprep.subr.mxu0 0.0
    %303 = vmatpush1.msra.mxu0 0.0
    %304 = vmatprep.subr.mxu0 0.0
    %305 = vmatpush1.msra.mxu0 0.0
    %306 = vmatprep.subr.mxu0 0.0
    %307 = vmatpush1.msra.mxu0 0.0
    %308 = vmatprep.subr.mxu0 0.0
    %309 = vmatpush1.msra.mxu0 0.0
    %310 = vmatprep.subr.mxu0 0.0
    %311 = vmatpush1.msra.mxu0 0.0
    %312 = vmatprep.subr.mxu0 0.0
    %313 = vmatpush1.msra.mxu0 0.0
    %314 = vmatprep.subr.mxu0 0.0
    %315 = vmatpush1.msra.mxu0 0.0
    %316 = vmatprep.subr.mxu0 0.0
    %317 = vmatpush1.msra.mxu0 0.0
    %318 = vmatprep.subr.mxu0 0.0
    %319 = vmatpush1.msra.mxu0 0.0
    %320 = vmatprep.subr.mxu0 0.0
    %321 = vmatpush1.msra.mxu0 0.0
    %322 = vmatprep.subr.mxu0 0.0
    %323 = vmatpush1.msra.mxu0 0.0
    %324 = vmatprep.subr.mxu0 0.0
    %325 = vmatpush1.msra.mxu0 0.0
    %326 = vmatprep.subr.mxu0 0.0
    %327 = vmatpush1.msra.mxu0 0.0
    %328 = vmatprep.subr.mxu0 0.0
    %329 = vmatpush1.msra.mxu0 0.0
    %330 = vmatprep.mubr.f32.mxu0 0.0
    %v331 = vand.u32 %v29, 4294901760
    %v332 = vsub.f32 %v29, %v331
    %333 = vmatmul.mubr.f32.gmra.mrb[0].mxu0 %v332
    %v334 = vpop.f32.mrb[0].mxu0
    %v335 = vadd.f32 %v237, %v334
    %v336 = vpop.f32.mrb[0].mxu0
    %337 = vmatprep.mubr.f32.mxu0 0.0
    %v338 = vand.u32 %v32, 4294901760
    %v339 = vsub.f32 %v32, %v338
    %340 = vmatmul.mubr.f32.gmra.mrb[0].mxu0 %v339
    %v341 = vpop.f32.mrb[0].mxu0
    %v342 = vadd.f32 %v243, %v341
    %v343 = vpop.f32.mrb[0].mxu0
    %344 = vmatprep.mubr.f32.mxu0 0.0
    %v345 = vand.u32 %v35, 4294901760
    %v346 = vsub.f32 %v35, %v345
    %347 = vmatmul.mubr.f32.gmra.mrb[0].mxu0 %v346
    %v348 = vpop.f32.mrb[0].mxu0
    %v349 = vadd.f32 %v249, %v348
    %v350 = vpop.f32.mrb[0].mxu0
    %351 = vmatprep.mubr.f32.mxu0 0.0
    %v352 = vand.u32 %v38, 4294901760
    %v353 = vsub.f32 %v38, %v352
    %354 = vmatmul.mubr.f32.gmra.mrb[0].mxu0 %v353
    %v355 = vpop.f32.mrb[0].mxu0
    %v356 = vadd.f32 %v255, %v355
    %v357 = vpop.f32.mrb[0].mxu0
    %358 = vdwg.mxu0
    %359 = vmatprep.subr.mxu0 0.0
    %v360 = vand.u32 %v23, 4294901760
    %361 = vmatpush1.msra.mxu0 %v360
    %362 = vmatprep.subr.mxu0 0.0
    %v363 = vand.u32 %v24, 4294901760
    %364 = vmatpush1.msra.mxu0 %v363
    %365 = vmatprep.subr.mxu0 0.0
    %v366 = vand.u32 %v25, 4294901760
    %367 = vmatpush1.msra.mxu0 %v366
    %368 = vmatprep.subr.mxu0 0.0
    %v369 = vand.u32 %v26, 4294901760
    %370 = vmatpush1.msra.mxu0 %v369
    %371 = vmatprep.subr.mxu0 0.0
    %372 = vmatpush1.msra.mxu0 0.0
    %373 = vmatprep.subr.mxu0 0.0
    %374 = vmatpush1.msra.mxu0 0.0
    %375 = vmatprep.subr.mxu0 0.0
    %376 = vmatpush1.msra.mxu0 0.0
    %377 = vmatprep.subr.mxu0 0.0
    %378 = vmatpush1.msra.mxu0 0.0
    %379 = vmatprep.subr.mxu0 0.0
    %380 = vmatpush1.msra.mxu0 0.0
    %381 = vmatprep.subr.mxu0 0.0
    %382 = vmatpush1.msra.mxu0 0.0
    %383 = vmatprep.subr.mxu0 0.0
    %384 = vmatpush1.msra.mxu0 0.0
    %385 = vmatprep.subr.mxu0 0.0
    %386 = vmatpush1.msra.mxu0 0.0
    %387 = vmatprep.subr.mxu0 0.0
    %388 = vmatpush1.msra.mxu0 0.0
    %389 = vmatprep.subr.mxu0 0.0
    %390 = vmatpush1.msra.mxu0 0.0
    %391 = vmatprep.subr.mxu0 0.0
    %392 = vmatpush1.msra.mxu0 0.0
    %393 = vmatprep.subr.mxu0 0.0
    %394 = vmatpush1.msra.mxu0 0.0
    %395 = vmatprep.subr.mxu0 0.0
    %396 = vmatpush1.msra.mxu0 0.0
    %397 = vmatprep.subr.mxu0 0.0
    %398 = vmatpush1.msra.mxu0 0.0
    %399 = vmatprep.subr.mxu0 0.0
    %400 = vmatpush1.msra.mxu0 0.0
    %401 = vmatprep.subr.mxu0 0.0
    %402 = vmatpush1.msra.mxu0 0.0
    %403 = vmatprep.subr.mxu0 0.0
    %404 = vmatpush1.msra.mxu0 0.0
    %405 = vmatprep.subr.mxu0 0.0
    %406 = vmatpush1.msra.mxu0 0.0
    %407 = vmatprep.subr.mxu0 0.0
    %408 = vmatpush1.msra.mxu0 0.0
    %409 = vmatprep.subr.mxu0 0.0
    %410 = vmatpush1.msra.mxu0 0.0
    %411 = vmatprep.subr.mxu0 0.0
    %412 = vmatpush1.msra.mxu0 0.0
    %413 = vmatprep.subr.mxu0 0.0
    %414 = vmatpush1.msra.mxu0 0.0
    %415 = vmatprep.subr.mxu0 0.0
    %416 = vmatpush1.msra.mxu0 0.0
    %417 = vmatprep.subr.mxu0 0.0
    %418 = vmatpush1.msra.mxu0 0.0
    %419 = vmatprep.subr.mxu0 0.0
    %420 = vmatpush1.msra.mxu0 0.0
    %421 = vmatprep.subr.mxu0 0.0
    %422 = vmatpush1.msra.mxu0 0.0
    %423 = vmatprep.subr.mxu0 0.0
    %424 = vmatpush1.msra.mxu0 0.0
    %425 = vmatprep.subr.mxu0 0.0
    %426 = vmatpush1.msra.mxu0 0.0
    %427 = vmatprep.mubr.f32.mxu0 0.0
    %v428 = vand.u32 %v29, 4294901760
    %v429 = vsub.f32 %v29, %v428
    %v430 = vand.u32 %v429, 4294901760
    %431 = vmatmul.mubr.f32.gmra.mrb[0].mxu0 %v430
    %v432 = vpop.f32.mrb[0].mxu0
    %v433 = vadd.f32 %v335, %v432
    %v434 = vpop.f32.mrb[0].mxu0
    %435 = vmatprep.mubr.f32.mxu0 0.0
    %v436 = vand.u32 %v32, 4294901760
    %v437 = vsub.f32 %v32, %v436
    %v438 = vand.u32 %v437, 4294901760
    %439 = vmatmul.mubr.f32.gmra.mrb[0].mxu0 %v438
    %v440 = vpop.f32.mrb[0].mxu0
    %v441 = vadd.f32 %v342, %v440
    %v442 = vpop.f32.mrb[0].mxu0
    %443 = vmatprep.mubr.f32.mxu0 0.0
    %v444 = vand.u32 %v35, 4294901760
    %v445 = vsub.f32 %v35, %v444
    %v446 = vand.u32 %v445, 4294901760
    %447 = vmatmul.mubr.f32.gmra.mrb[0].mxu0 %v446
    %v448 = vpop.f32.mrb[0].mxu0
    %v449 = vadd.f32 %v349, %v448
    %v450 = vpop.f32.mrb[0].mxu0
    %451 = vmatprep.mubr.f32.mxu0 0.0
    %v452 = vand.u32 %v38, 4294901760
    %v453 = vsub.f32 %v38, %v452
    %v454 = vand.u32 %v453, 4294901760
    %455 = vmatmul.mubr.f32.gmra.mrb[0].mxu0 %v454
    %v456 = vpop.f32.mrb[0].mxu0
    %v457 = vadd.f32 %v356, %v456
    %v458 = vpop.f32.mrb[0].mxu0
    %459 = vdwg.mxu0
    %460 = vmatprep.subr.mxu0 0.0
    %v461 = vand.u32 %v23, 4294901760
    %v462 = vsub.f32 %v23, %v461
    %v463 = vand.u32 %v462, 4294901760
    %464 = vmatpush1.msra.mxu0 %v463
    %465 = vmatprep.subr.mxu0 0.0
    %v466 = vand.u32 %v24, 4294901760
    %v467 = vsub.f32 %v24, %v466
    %v468 = vand.u32 %v467, 4294901760
    %469 = vmatpush1.msra.mxu0 %v468
    %470 = vmatprep.subr.mxu0 0.0
    %v471 = vand.u32 %v25, 4294901760
    %v472 = vsub.f32 %v25, %v471
    %v473 = vand.u32 %v472, 4294901760
    %474 = vmatpush1.msra.mxu0 %v473
    %475 = vmatprep.subr.mxu0 0.0
    %v476 = vand.u32 %v26, 4294901760
    %v477 = vsub.f32 %v26, %v476
    %v478 = vand.u32 %v477, 4294901760
    %479 = vmatpush1.msra.mxu0 %v478
    %480 = vmatprep.subr.mxu0 0.0
    %481 = vmatpush1.msra.mxu0 0.0
    %482 = vmatprep.subr.mxu0 0.0
    %483 = vmatpush1.msra.mxu0 0.0
    %484 = vmatprep.subr.mxu0 0.0
    %485 = vmatpush1.msra.mxu0 0.0
    %486 = vmatprep.subr.mxu0 0.0
    %487 = vmatpush1.msra.mxu0 0.0
    %488 = vmatprep.subr.mxu0 0.0
    %489 = vmatpush1.msra.mxu0 0.0
    %490 = vmatprep.subr.mxu0 0.0
    %491 = vmatpush1.msra.mxu0 0.0
    %492 = vmatprep.subr.mxu0 0.0
    %493 = vmatpush1.msra.mxu0 0.0
    %494 = vmatprep.subr.mxu0 0.0
    %495 = vmatpush1.msra.mxu0 0.0
    %496 = vmatprep.subr.mxu0 0.0
    %497 = vmatpush1.msra.mxu0 0.0
    %498 = vmatprep.subr.mxu0 0.0
    %499 = vmatpush1.msra.mxu0 0.0
    %500 = vmatprep.subr.mxu0 0.0
    %501 = vmatpush1.msra.mxu0 0.0
    %502 = vmatprep.subr.mxu0 0.0
    %503 = vmatpush1.msra.mxu0 0.0
    %504 = vmatprep.subr.mxu0 0.0
    %505 = vmatpush1.msra.mxu0 0.0
    %506 = vmatprep.subr.mxu0 0.0
    %507 = vmatpush1.msra.mxu0 0.0
    %508 = vmatprep.subr.mxu0 0.0
    %509 = vmatpush1.msra.mxu0 0.0
    %510 = vmatprep.subr.mxu0 0.0
    %511 = vmatpush1.msra.mxu0 0.0
    %512 = vmatprep.subr.mxu0 0.0
    %513 = vmatpush1.msra.mxu0 0.0
    %514 = vmatprep.subr.mxu0 0.0
    %515 = vmatpush1.msra.mxu0 0.0
    %516 = vmatprep.subr.mxu0 0.0
    %517 = vmatpush1.msra.mxu0 0.0
    %518 = vmatprep.subr.mxu0 0.0
    %519 = vmatpush1.msra.mxu0 0.0
    %520 = vmatprep.subr.mxu0 0.0
    %521 = vmatpush1.msra.mxu0 0.0
    %522 = vmatprep.subr.mxu0 0.0
    %523 = vmatpush1.msra.mxu0 0.0
    %524 = vmatprep.subr.mxu0 0.0
    %525 = vmatpush1.msra.mxu0 0.0
    %526 = vmatprep.subr.mxu0 0.0
    %527 = vmatpush1.msra.mxu0 0.0
    %528 = vmatprep.subr.mxu0 0.0
    %529 = vmatpush1.msra.mxu0 0.0
    %530 = vmatprep.subr.mxu0 0.0
    %531 = vmatpush1.msra.mxu0 0.0
    %532 = vmatprep.subr.mxu0 0.0
    %533 = vmatpush1.msra.mxu0 0.0
    %534 = vmatprep.subr.mxu0 0.0
    %535 = vmatpush1.msra.mxu0 0.0
    %536 = vmatprep.mubr.f32.mxu0 0.0
    %v537 = vand.u32 %v29, 4294901760
    %538 = vmatmul.mubr.f32.gmra.mrb[0].mxu0 %v537
    %v539 = vpop.f32.mrb[0].mxu0
    %v540 = vadd.f32 %v433, %v539
    %v541 = vpop.f32.mrb[0].mxu0
    %542 = vmatprep.mubr.f32.mxu0 0.0
    %v543 = vand.u32 %v32, 4294901760
    %544 = vmatmul.mubr.f32.gmra.mrb[0].mxu0 %v543
    %v545 = vpop.f32.mrb[0].mxu0
    %v546 = vadd.f32 %v441, %v545
    %v547 = vpop.f32.mrb[0].mxu0
    %548 = vmatprep.mubr.f32.mxu0 0.0
    %v549 = vand.u32 %v35, 4294901760
    %550 = vmatmul.mubr.f32.gmra.mrb[0].mxu0 %v549
    %v551 = vpop.f32.mrb[0].mxu0
    %v552 = vadd.f32 %v449, %v551
    %v553 = vpop.f32.mrb[0].mxu0
    %554 = vmatprep.mubr.f32.mxu0 0.0
    %v555 = vand.u32 %v38, 4294901760
    %556 = vmatmul.mubr.f32.gmra.mrb[0].mxu0 %v555
    %v557 = vpop.f32.mrb[0].mxu0
    %v558 = vadd.f32 %v457, %v557
    %v559 = vpop.f32.mrb[0].mxu0
    %560 = vdwg.mxu0
    %561 = vmatprep.subr.mxu0 0.0
    %v562 = vand.u32 %v23, 4294901760
    %563 = vmatpush1.msra.mxu0 %v562
    %564 = vmatprep.subr.mxu0 0.0
    %v565 = vand.u32 %v24, 4294901760
    %566 = vmatpush1.msra.mxu0 %v565
    %567 = vmatprep.subr.mxu0 0.0
    %v568 = vand.u32 %v25, 4294901760
    %569 = vmatpush1.msra.mxu0 %v568
    %570 = vmatprep.subr.mxu0 0.0
    %v571 = vand.u32 %v26, 4294901760
    %572 = vmatpush1.msra.mxu0 %v571
    %573 = vmatprep.subr.mxu0 0.0
    %574 = vmatpush1.msra.mxu0 0.0
    %575 = vmatprep.subr.mxu0 0.0
    %576 = vmatpush1.msra.mxu0 0.0
    %577 = vmatprep.subr.mxu0 0.0
    %578 = vmatpush1.msra.mxu0 0.0
    %579 = vmatprep.subr.mxu0 0.0
    %580 = vmatpush1.msra.mxu0 0.0
    %581 = vmatprep.subr.mxu0 0.0
    %582 = vmatpush1.msra.mxu0 0.0
    %583 = vmatprep.subr.mxu0 0.0
    %584 = vmatpush1.msra.mxu0 0.0
    %585 = vmatprep.subr.mxu0 0.0
    %586 = vmatpush1.msra.mxu0 0.0
    %587 = vmatprep.subr.mxu0 0.0
    %588 = vmatpush1.msra.mxu0 0.0
    %589 = vmatprep.subr.mxu0 0.0
    %590 = vmatpush1.msra.mxu0 0.0
    %591 = vmatprep.subr.mxu0 0.0
    %592 = vmatpush1.msra.mxu0 0.0
    %593 = vmatprep.subr.mxu0 0.0
    %594 = vmatpush1.msra.mxu0 0.0
    %595 = vmatprep.subr.mxu0 0.0
    %596 = vmatpush1.msra.mxu0 0.0
    %597 = vmatprep.subr.mxu0 0.0
    %598 = vmatpush1.msra.mxu0 0.0
    %599 = vmatprep.subr.mxu0 0.0
    %600 = vmatpush1.msra.mxu0 0.0
    %601 = vmatprep.subr.mxu0 0.0
    %602 = vmatpush1.msra.mxu0 0.0
    %603 = vmatprep.subr.mxu0 0.0
    %604 = vmatpush1.msra.mxu0 0.0
    %605 = vmatprep.subr.mxu0 0.0
    %606 = vmatpush1.msra.mxu0 0.0
    %607 = vmatprep.subr.mxu0 0.0
    %608 = vmatpush1.msra.mxu0 0.0
    %609 = vmatprep.subr.mxu0 0.0
    %610 = vmatpush1.msra.mxu0 0.0
    %611 = vmatprep.subr.mxu0 0.0
    %612 = vmatpush1.msra.mxu0 0.0
    %613 = vmatprep.subr.mxu0 0.0
    %614 = vmatpush1.msra.mxu0 0.0
    %615 = vmatprep.subr.mxu0 0.0
    %616 = vmatpush1.msra.mxu0 0.0
    %617 = vmatprep.subr.mxu0 0.0
    %618 = vmatpush1.msra.mxu0 0.0
    %619 = vmatprep.subr.mxu0 0.0
    %620 = vmatpush1.msra.mxu0 0.0
    %621 = vmatprep.subr.mxu0 0.0
    %622 = vmatpush1.msra.mxu0 0.0
    %623 = vmatprep.subr.mxu0 0.0
    %624 = vmatpush1.msra.mxu0 0.0
    %625 = vmatprep.subr.mxu0 0.0
    %626 = vmatpush1.msra.mxu0 0.0
    %627 = vmatprep.subr.mxu0 0.0
    %628 = vmatpush1.msra.mxu0 0.0
    %629 = vmatprep.mubr.f32.mxu0 0.0
    %v630 = vand.u32 %v29, 4294901760
    %631 = vmatmul.mubr.f32.gmra.mrb[0].mxu0 %v630
    %v632 = vpop.f32.mrb[0].mxu0
    %v633 = vadd.f32 %v540, %v632
    %v634 = vpop.f32.mrb[0].mxu0
    %635 = vmatprep.mubr.f32.mxu0 0.0
    %v636 = vand.u32 %v32, 4294901760
    %637 = vmatmul.mubr.f32.gmra.mrb[0].mxu0 %v636
    %v638 = vpop.f32.mrb[0].mxu0
    %v639 = vadd.f32 %v546, %v638
    %v640 = vpop.f32.mrb[0].mxu0
    %641 = vmatprep.mubr.f32.mxu0 0.0
    %v642 = vand.u32 %v35, 4294901760
    %643 = vmatmul.mubr.f32.gmra.mrb[0].mxu0 %v642
    %v644 = vpop.f32.mrb[0].mxu0
    %v645 = vadd.f32 %v552, %v644
    %v646 = vpop.f32.mrb[0].mxu0
    %647 = vmatprep.mubr.f32.mxu0 0.0
    %v648 = vand.u32 %v38, 4294901760
    %649 = vmatmul.mubr.f32.gmra.mrb[0].mxu0 %v648
    %v650 = vpop.f32.mrb[0].mxu0
    %v651 = vadd.f32 %v558, %v650
    %v652 = vpop.f32.mrb[0].mxu0
    %653 = vdwg.mxu0
    %v654 = vmul.f32 %v633, 6.0
    %v655 = vmul.f32 %v639, 6.0
    %v656 = vmul.f32 %v645, 6.0
    %v657 = vmul.f32 %v651, 6.0
    %658 = vst.msk [vmem:[#allocation5] sm:$0xff] %vm27, %v654
    %659 = vst.msk [vmem:[#allocation5 + $0x8] sm:$0xff] %vm27, %v655
    %660 = vst.msk [vmem:[#allocation5 + $0x10] sm:$0xff] %vm27, %v656
    %661 = vst.msk [vmem:[#allocation5 + $0x18] sm:$0xff] %vm27, %v657
    // Predicated region
    $region10: #{tpu_custom_call.1} parent=1 // pred_check
      _
    $region11: #{tpu_custom_call.1} parent=1 // pred_check_branch
      %663 = sbr.rel (0) target = $region13
    $region12: #{tpu_custom_call.1} parent=1 // pred_region
      %s665 = ssub.s32 512, 512
      %666 = vsyncadd [#allocation4], %s665
      %s667 = sshll.u32 [#allocation5], 4
      %s668 = int_to_ptr.vmem [resolvable:$true] %s667
      %673 = dma.vmem_to_hbm [thread:$0]  %s668, 512, %s1, [#allocation4], 128, 128, 8
    $region13: #{tpu_custom_call.1} parent=1 // pred_fallthru
      _
    // Predicated region
    $region14: #{tpu_custom_call.1} parent=1 // pred_check
      _
    $region15: #{tpu_custom_call.1} parent=1 // pred_check_branch
      %675 = sbr.rel (0) target = $region17
    $region16: #{tpu_custom_call.1} parent=1 // pred_region
      %676 = dma.done [#allocation4], 512
    $region17: #{tpu_custom_call.1} parent=1 // pred_fallthru
      _
    %677 = vsyncpa [#allocation3], 1
    %678 = vsyncpa [#allocation4], 1

</llo_original>
